<compile_context>
chip_gen: v7x
topology: tpu7x:2x2x1
jax: 0.10.0
libtpu: 0.0.40
codegen_flags: <defaults>
</compile_context>

<pallas_src>
import functools

import jax
import jax.numpy as jnp
from jax.experimental import pallas as pl
from jax.experimental.pallas import tpu as pltpu

LANE = 128     # lane width: every feature dim is padded to this
SUBLANE = 8    # f32 sublane granularity


def mlp_kernel(x_ref, w_ref, b_ref, o_ref):
    """One batch tile of the fused MLP.

    x_ref : (TB, 128)   lane-padded input tile
    w_ref : (384, 128)  W1 / W2 / W3 stacked along rows (each 128x128 padded)
    b_ref : (24, 128)   b1 at row 0, b2 at row 8, b3 at row 16 (lane-padded)
    o_ref : (TB, 128)   lane-dense output tile (valid columns = [:out_features])
    """
    x = x_ref[...]

    # Static, sublane-aligned slices of the packed parameter slabs.
    w1 = w_ref[0:128, :]
    w2 = w_ref[128:256, :]
    w3 = w_ref[256:384, :]
    b1 = b_ref[0:1, :]
    b2 = b_ref[8:9, :]
    b3 = b_ref[16:17, :]

    # All accumulation in f32 (preferred_element_type); epilogues in f32 too,
    # which is also the v5e-friendly choice if operands ever move to bf16.
    h1 = jnp.dot(x, w1, preferred_element_type=jnp.float32) + b1
    h1 = jnp.maximum(h1, 0.0)
    h2 = jnp.dot(h1, w2, preferred_element_type=jnp.float32) + b2
    h2 = jnp.maximum(h2, 0.0)
    out = jnp.dot(h2, w3, preferred_element_type=jnp.float32) + b3

    o_ref[...] = out.astype(o_ref.dtype)


def _round_up(n, m):
    return (n + m - 1) // m * m


def _pad2d(a, rows, cols):
    r, c = a.shape
    return jnp.pad(a, ((0, rows - r), (0, cols - c)))


def pack_params(params):
    """Pack (w1,b1,w2,b2,w3,b3) into one weight slab and one bias slab."""
    w1, b1, w2, b2, w3, b3 = params
    w_packed = jnp.concatenate(
        [_pad2d(w1, LANE, LANE), _pad2d(w2, LANE, LANE), _pad2d(w3, LANE, LANE)],
        axis=0)                                                     # (384, 128)
    b_packed = jnp.concatenate(
        [_pad2d(b1, SUBLANE, LANE), _pad2d(b2, SUBLANE, LANE),
         _pad2d(b3, SUBLANE, LANE)],
        axis=0)                                                     # (24, 128)
    return w_packed, b_packed


@functools.partial(jax.jit, static_argnames=("out_features",))
def mlp_forward(x, params, out_features=3):
    B, _ = x.shape
    w_packed, b_packed = pack_params(params)

    # Batch tile: large enough to amortize per-grid-step overhead (~0.35us),
    # clamped to the (padded) batch for tiny inputs.
    TB = min(512, _round_up(B, SUBLANE))
    B_pad = _round_up(B, TB)
    x_pad = _pad2d(x, B_pad, LANE)

    out_pad = pl.pallas_call(
        mlp_kernel,
        out_shape=jax.ShapeDtypeStruct((B_pad, LANE), jnp.float32),
        grid=(B_pad // TB,),
        in_specs=[
            pl.BlockSpec((TB, LANE), lambda i: (i, 0)),              # x tile
            pl.BlockSpec((3 * LANE, LANE), lambda i: (0, 0)),        # weights (resident)
            pl.BlockSpec((3 * SUBLANE, LANE), lambda i: (0, 0)),     # biases (resident)
        ],
        out_specs=pl.BlockSpec((TB, LANE), lambda i: (i, 0)),
        compiler_params=pltpu.CompilerParams(
            dimension_semantics=("parallel",)),  # shard batch tiles across TCs on v7x
    )(x_pad, w_packed, b_packed)

    # Slice back to the logical (B, out_features) shape outside the kernel.
    return out_pad[:B, :out_features]


def init_linear(key, fan_in, fan_out):
    # Deterministic init mimicking PyTorch nn.Linear: U(-1/sqrt(fan_in), 1/sqrt(fan_in)).
    kw, kb = jax.random.split(key)
    bound = 1.0 / jnp.sqrt(float(fan_in))
    # Stored as (in, out) so the kernel computes x @ W.
    w = jax.random.uniform(kw, (fan_in, fan_out), jnp.float32, -bound, bound)
    b = jax.random.uniform(kb, (1, fan_out), jnp.float32, -bound, bound)
    return w, b


def make_params(key, in_features=4, h1=8, h2=9, out_features=3):
    k1, k2, k3 = jax.random.split(key, 3)
    w1, b1 = init_linear(k1, in_features, h1)
    w2, b2 = init_linear(k2, h1, h2)
    w3, b3 = init_linear(k3, h2, out_features)
    return (w1, b1, w2, b2, w3, b3)


def reference_forward(x, params):
    w1, b1, w2, b2, w3, b3 = params
    h = jnp.maximum(x @ w1 + b1, 0.0)
    h = jnp.maximum(h @ w2 + b2, 0.0)
    return h @ w3 + b3


if __name__ == "__main__":
    key = jax.random.PRNGKey(0)
    kx, kp = jax.random.split(key)

    B, in_features, out_features = 8, 4, 3
    x = jax.random.normal(kx, (B, in_features), jnp.float32)
    params = make_params(kp, in_features=in_features, h1=8, h2=9,
                         out_features=out_features)

    out = mlp_forward(x, params, out_features=out_features)
    jax.block_until_ready(out)

    ref = reference_forward(x, params)
    assert out.shape == (B, out_features), out.shape
    assert jnp.allclose(out, ref, atol=1e-5, rtol=1e-5), "mismatch vs reference"

    print("KERNEL_OK")
</pallas_src>

<mosaic_0001>
module attributes {stable_mosaic.version = 11 : i64} {
  func.func @mlp_kernel(%arg0: i32, %arg1: memref<8x128xf32, #tpu.memory_space<vmem>>, %arg2: memref<384x128xf32, #tpu.memory_space<vmem>>, %arg3: memref<24x128xf32, #tpu.memory_space<vmem>>, %arg4: memref<8x128xf32, #tpu.memory_space<vmem>>) attributes {dimension_semantics = [#tpu.dimension_semantics<parallel>], iteration_bounds = array<i64: 1>, scalar_prefetch = 0 : i64, scratch_operands = 0 : i64, tpu.core_type = #tpu.core_type<tc>, window_params = [{transform_indices = @transform_0, window_bounds = array<i64: 8, 128>}, {pipeline_mode = #tpu.pipeline_mode<synchronous>, transform_indices = @transform_1, window_bounds = array<i64: 384, 128>}, {pipeline_mode = #tpu.pipeline_mode<synchronous>, transform_indices = @transform_2, window_bounds = array<i64: 24, 128>}, {transform_indices = @transform_3, window_bounds = array<i64: 8, 128>}]} {
    %c0 = arith.constant 0 : index
    %c0_0 = arith.constant 0 : index
    %0 = vector.load %arg1[%c0, %c0_0] : memref<8x128xf32, #tpu.memory_space<vmem>>, vector<8x128xf32>
    %c0_1 = arith.constant 0 : index
    %c0_2 = arith.constant 0 : index
    %1 = vector.load %arg2[%c0_1, %c0_2] : memref<384x128xf32, #tpu.memory_space<vmem>>, vector<128x128xf32>
    %c128 = arith.constant 128 : index
    %c0_3 = arith.constant 0 : index
    %2 = vector.load %arg2[%c128, %c0_3] : memref<384x128xf32, #tpu.memory_space<vmem>>, vector<128x128xf32>
    %c256 = arith.constant 256 : index
    %c0_4 = arith.constant 0 : index
    %3 = vector.load %arg2[%c256, %c0_4] : memref<384x128xf32, #tpu.memory_space<vmem>>, vector<128x128xf32>
    %c0_5 = arith.constant 0 : index
    %c0_6 = arith.constant 0 : index
    %4 = vector.load %arg3[%c0_5, %c0_6] : memref<24x128xf32, #tpu.memory_space<vmem>>, vector<1x128xf32>
    %c8 = arith.constant 8 : index
    %c0_7 = arith.constant 0 : index
    %5 = vector.load %arg3[%c8, %c0_7] : memref<24x128xf32, #tpu.memory_space<vmem>>, vector<1x128xf32>
    %c16 = arith.constant 16 : index
    %c0_8 = arith.constant 0 : index
    %6 = vector.load %arg3[%c16, %c0_8] : memref<24x128xf32, #tpu.memory_space<vmem>>, vector<1x128xf32>
    %cst = arith.constant dense<0.000000e+00> : vector<8x128xf32>
    %7 = tpu.matmul %0, %1, %cst {dimension_numbers = #tpu.dot_dimension_numbers<[1], [0], [0], [1], [0, 0, 1, 1], [], []>} : vector<8x128xf32>, vector<128x128xf32>, vector<8x128xf32> -> vector<8x128xf32>
    %8 = vector.broadcast %4 : vector<1x128xf32> to vector<8x128xf32>
    %9 = arith.addf %7, %8 : vector<8x128xf32>
    %cst_9 = arith.constant 0.000000e+00 : f32
    %10 = vector.broadcast %cst_9 : f32 to vector<8x128xf32>
    %11 = arith.maximumf %9, %10 : vector<8x128xf32>
    %cst_10 = arith.constant dense<0.000000e+00> : vector<8x128xf32>
    %12 = tpu.matmul %11, %2, %cst_10 {dimension_numbers = #tpu.dot_dimension_numbers<[1], [0], [0], [1], [0, 0, 1, 1], [], []>} : vector<8x128xf32>, vector<128x128xf32>, vector<8x128xf32> -> vector<8x128xf32>
    %13 = vector.broadcast %5 : vector<1x128xf32> to vector<8x128xf32>
    %14 = arith.addf %12, %13 : vector<8x128xf32>
    %cst_11 = arith.constant 0.000000e+00 : f32
    %15 = vector.broadcast %cst_11 : f32 to vector<8x128xf32>
    %16 = arith.maximumf %14, %15 : vector<8x128xf32>
    %cst_12 = arith.constant dense<0.000000e+00> : vector<8x128xf32>
    %17 = tpu.matmul %16, %3, %cst_12 {dimension_numbers = #tpu.dot_dimension_numbers<[1], [0], [0], [1], [0, 0, 1, 1], [], []>} : vector<8x128xf32>, vector<128x128xf32>, vector<8x128xf32> -> vector<8x128xf32>
    %18 = vector.broadcast %6 : vector<1x128xf32> to vector<8x128xf32>
    %19 = arith.addf %17, %18 : vector<8x128xf32>
    %c0_13 = arith.constant 0 : index
    %c0_14 = arith.constant 0 : index
    %20 = vector.load %arg4[%c0_13, %c0_14] : memref<8x128xf32, #tpu.memory_space<vmem>>, vector<8x128xf32>
    tpu.vector_store %arg4[%c0_13, %c0_14], %19 {strides = array<i32>} : memref<8x128xf32, #tpu.memory_space<vmem>>, vector<8x128xf32>,
    return
  }
  func.func @transform_0(%arg0: i32) -> (i32, i32) {
    %c0_i32 = arith.constant 0 : i32
    %c0_i32_0 = arith.constant 0 : i32
    return %arg0, %c0_i32 : i32, i32
  }
  func.func @transform_1(%arg0: i32) -> (i32, i32) {
    %c0_i32 = arith.constant 0 : i32
    %c0_i32_0 = arith.constant 0 : i32
    %c0_i32_1 = arith.constant 0 : i32
    return %c0_i32, %c0_i32_0 : i32, i32
  }
  func.func @transform_2(%arg0: i32) -> (i32, i32) {
    %c0_i32 = arith.constant 0 : i32
    %c0_i32_0 = arith.constant 0 : i32
    %c0_i32_1 = arith.constant 0 : i32
    return %c0_i32, %c0_i32_0 : i32, i32
  }
  func.func @transform_3(%arg0: i32) -> (i32, i32) {
    %c0_i32 = arith.constant 0 : i32
    %c0_i32_0 = arith.constant 0 : i32
    return %arg0, %c0_i32 : i32, i32
  }
}

</mosaic_0001>

<llo_original>
// kernel: mlp_forward.1
$region0: #{mlp_forward.1}
  #allocation0 [shape = 'u32[]', space=smem, size = 0x4, offset = 0x4, fixed_abs, tag = 'smem constant byte address 0x4 - core index']
  #allocation1 [shape = 'u32[144,128]{1,0:T(1,128)}', space=vmem, size = 0x12000, scoped, tag = 'internal scratch']
  %s0 = inlined_call_operand.vmem [shape: f32[8,128], index: 0, kind: input, shape index: {}]
  %s1 = inlined_call_operand.vmem [shape: f32[384,128], index: 1, kind: input, shape index: {}]
  %s2 = inlined_call_operand.vmem [shape: f32[24,128], index: 2, kind: input, shape index: {}]
  %s3 = inlined_call_operand.vmem [shape: f32[8,128], index: 3, kind: output, shape index: {}]
  %s4 = sld [smem:[#allocation0]]
  $region22: #{mlp_forward.1} parent=0
    _
  %s6 = ssub.s32 1, %s4
  %s7 = scalar_select 0, %s6, %s4
  // Predicated region
  $region2: #{mlp_forward.1} parent=0 // pred_check
    _
  $region3: #{mlp_forward.1} parent=0 // pred_check_branch
    %9 = sbr.rel (0) target = $region5
  $region4: #{mlp_forward.1} parent=0 // pred_region
    _
  $region5: #{mlp_forward.1} parent=0 // pred_fallthru
    _
  // Predicated region
  $region6: #{mlp_forward.1} parent=0 // pred_check
    _
  $region7: #{mlp_forward.1} parent=0 // pred_check_branch
    %11 = sbr.rel (0) target = $region9
  $region8: #{mlp_forward.1} parent=0 // pred_region
    _
  $region9: #{mlp_forward.1} parent=0 // pred_fallthru
    _
  // Predicated region
  $region10: #{mlp_forward.1} parent=0 // pred_check
    _
  $region11: #{mlp_forward.1} parent=0 // pred_check_branch
    %13 = sbr.rel (0) target = $region13
  $region12: #{mlp_forward.1} parent=0 // pred_region
    _
  $region13: #{mlp_forward.1} parent=0 // pred_fallthru
    _
  %v14 = vld [vmem:[%s0] sm:$0xff]
  %v15 = vld [vmem:[%s1] sm:$0xff]
  %v16 = vld [vmem:[%s1 + $0x8] sm:$0xff]
  %v17 = vld [vmem:[%s1 + $0x10] sm:$0xff]
  %v18 = vld [vmem:[%s1 + $0x18] sm:$0xff]
  %v19 = vld [vmem:[%s1 + $0x20] sm:$0xff]
  %v20 = vld [vmem:[%s1 + $0x28] sm:$0xff]
  %v21 = vld [vmem:[%s1 + $0x30] sm:$0xff]
  %v22 = vld [vmem:[%s1 + $0x38] sm:$0xff]
  %v23 = vld [vmem:[%s1 + $0x40] sm:$0xff]
  %v24 = vld [vmem:[%s1 + $0x48] sm:$0xff]
  %v25 = vld [vmem:[%s1 + $0x50] sm:$0xff]
  %v26 = vld [vmem:[%s1 + $0x58] sm:$0xff]
  %v27 = vld [vmem:[%s1 + $0x60] sm:$0xff]
  %v28 = vld [vmem:[%s1 + $0x68] sm:$0xff]
  %v29 = vld [vmem:[%s1 + $0x70] sm:$0xff]
  %v30 = vld [vmem:[%s1 + $0x78] sm:$0xff]
  %v31 = vld [vmem:[%s1 + $0x80] sm:$0xff]
  %v32 = vld [vmem:[%s1 + $0x88] sm:$0xff]
  %v33 = vld [vmem:[%s1 + $0x90] sm:$0xff]
  %v34 = vld [vmem:[%s1 + $0x98] sm:$0xff]
  %v35 = vld [vmem:[%s1 + $0xa0] sm:$0xff]
  %v36 = vld [vmem:[%s1 + $0xa8] sm:$0xff]
  %v37 = vld [vmem:[%s1 + $0xb0] sm:$0xff]
  %v38 = vld [vmem:[%s1 + $0xb8] sm:$0xff]
  %v39 = vld [vmem:[%s1 + $0xc0] sm:$0xff]
  %v40 = vld [vmem:[%s1 + $0xc8] sm:$0xff]
  %v41 = vld [vmem:[%s1 + $0xd0] sm:$0xff]
  %v42 = vld [vmem:[%s1 + $0xd8] sm:$0xff]
  %v43 = vld [vmem:[%s1 + $0xe0] sm:$0xff]
  %v44 = vld [vmem:[%s1 + $0xe8] sm:$0xff]
  %v45 = vld [vmem:[%s1 + $0xf0] sm:$0xff]
  %v46 = vld [vmem:[%s1 + $0xf8] sm:$0xff]
  %v47 = vld [vmem:[%s1 + $0x100] sm:$0xff]
  %v48 = vld [vmem:[%s1 + $0x108] sm:$0xff]
  %v49 = vld [vmem:[%s1 + $0x110] sm:$0xff]
  %v50 = vld [vmem:[%s1 + $0x118] sm:$0xff]
  %v51 = vld [vmem:[%s1 + $0x120] sm:$0xff]
  %v52 = vld [vmem:[%s1 + $0x128] sm:$0xff]
  %v53 = vld [vmem:[%s1 + $0x130] sm:$0xff]
  %v54 = vld [vmem:[%s1 + $0x138] sm:$0xff]
  %v55 = vld [vmem:[%s1 + $0x140] sm:$0xff]
  %v56 = vld [vmem:[%s1 + $0x148] sm:$0xff]
  %v57 = vld [vmem:[%s1 + $0x150] sm:$0xff]
  %v58 = vld [vmem:[%s1 + $0x158] sm:$0xff]
  %v59 = vld [vmem:[%s1 + $0x160] sm:$0xff]
  %v60 = vld [vmem:[%s1 + $0x168] sm:$0xff]
  %v61 = vld [vmem:[%s1 + $0x170] sm:$0xff]
  %v62 = vld [vmem:[%s1 + $0x178] sm:$0xff]
  %v63 = vld [vmem:[%s2] sm:$0x1]
  %v64 = vld [vmem:[%s2 + $0x8] sm:$0x1]
  %v65 = vld [vmem:[%s2 + $0x10] sm:$0x1]
  %v66 = vlaneseq
  %v67 = vshrl.u32 %v66, 7
  %v68 = vsub.s32 0, %v67
  %v69 = vrot.slane %v63, %v68
  %70 = vmatprep.subr.mxu0 0.0
  %71 = vmatpush1.msra.mxu0 %v15
  %72 = vmatprep.subr.mxu0 0.0
  %73 = vmatpush1.msra.mxu0 %v16
  %74 = vmatprep.subr.mxu0 0.0
  %75 = vmatpush1.msra.mxu0 %v17
  %76 = vmatprep.subr.mxu0 0.0
  %77 = vmatpush1.msra.mxu0 %v18
  %78 = vmatprep.subr.mxu0 0.0
  %79 = vmatpush1.msra.mxu0 %v19
  %80 = vmatprep.subr.mxu0 0.0
  %81 = vmatpush1.msra.mxu0 %v20
  %82 = vmatprep.subr.mxu0 0.0
  %83 = vmatpush1.msra.mxu0 %v21
  %84 = vmatprep.subr.mxu0 0.0
  %85 = vmatpush1.msra.mxu0 %v22
  %86 = vmatprep.subr.mxu0 0.0
  %87 = vmatpush1.msra.mxu0 %v23
  %88 = vmatprep.subr.mxu0 0.0
  %89 = vmatpush1.msra.mxu0 %v24
  %90 = vmatprep.subr.mxu0 0.0
  %91 = vmatpush1.msra.mxu0 %v25
  %92 = vmatprep.subr.mxu0 0.0
  %93 = vmatpush1.msra.mxu0 %v26
  %94 = vmatprep.subr.mxu0 0.0
  %95 = vmatpush1.msra.mxu0 %v27
  %96 = vmatprep.subr.mxu0 0.0
  %97 = vmatpush1.msra.mxu0 %v28
  %98 = vmatprep.subr.mxu0 0.0
  %99 = vmatpush1.msra.mxu0 %v29
  %100 = vmatprep.subr.mxu0 0.0
  %101 = vmatpush1.msra.mxu0 %v30
  %102 = vmatprep.subr.mxu0 0.0
  %103 = vmatpush1.msra.mxu0 0.0
  %104 = vmatprep.subr.mxu0 0.0
  %105 = vmatpush1.msra.mxu0 0.0
  %106 = vmatprep.subr.mxu0 0.0
  %107 = vmatpush1.msra.mxu0 0.0
  %108 = vmatprep.subr.mxu0 0.0
  %109 = vmatpush1.msra.mxu0 0.0
  %110 = vmatprep.subr.mxu0 0.0
  %111 = vmatpush1.msra.mxu0 0.0
  %112 = vmatprep.subr.mxu0 0.0
  %113 = vmatpush1.msra.mxu0 0.0
  %114 = vmatprep.subr.mxu0 0.0
  %115 = vmatpush1.msra.mxu0 0.0
  %116 = vmatprep.subr.mxu0 0.0
  %117 = vmatpush1.msra.mxu0 0.0
  %118 = vmatprep.subr.mxu0 0.0
  %119 = vmatpush1.msra.mxu0 0.0
  %120 = vmatprep.subr.mxu0 0.0
  %121 = vmatpush1.msra.mxu0 0.0
  %122 = vmatprep.subr.mxu0 0.0
  %123 = vmatpush1.msra.mxu0 0.0
  %124 = vmatprep.subr.mxu0 0.0
  %125 = vmatpush1.msra.mxu0 0.0
  %126 = vmatprep.subr.mxu0 0.0
  %127 = vmatpush1.msra.mxu0 0.0
  %128 = vmatprep.subr.mxu0 0.0
  %129 = vmatpush1.msra.mxu0 0.0
  %130 = vmatprep.subr.mxu0 0.0
  %131 = vmatpush1.msra.mxu0 0.0
  %132 = vmatprep.subr.mxu0 0.0
  %133 = vmatpush1.msra.mxu0 0.0
  %134 = vmatprep.mubr.f32.mxu0 0.0
  %135 = vmatmul.mubr.f32.gmra.mrb[0].mxu0 %v14
  %v136 = vpop.f32.mrb[0].mxu0
  %v137 = vadd.f32 %v69, %v136
  %v138 = vpop.f32.mrb[0].mxu0
  %139 = vdwg.mxu0
  %v140 = vmax.f32 %v137, 0.0
  %v141 = vlaneseq
  %v142 = vshrl.u32 %v141, 7
  %v143 = vsub.s32 0, %v142
  %v144 = vrot.slane %v64, %v143
  %145 = vmatprep.subr.mxu0 0.0
  %146 = vmatpush1.msra.mxu0 %v31
  %147 = vmatprep.subr.mxu0 0.0
  %148 = vmatpush1.msra.mxu0 %v32
  %149 = vmatprep.subr.mxu0 0.0
  %150 = vmatpush1.msra.mxu0 %v33
  %151 = vmatprep.subr.mxu0 0.0
  %152 = vmatpush1.msra.mxu0 %v34
  %153 = vmatprep.subr.mxu0 0.0
  %154 = vmatpush1.msra.mxu0 %v35
  %155 = vmatprep.subr.mxu0 0.0
  %156 = vmatpush1.msra.mxu0 %v36
  %157 = vmatprep.subr.mxu0 0.0
  %158 = vmatpush1.msra.mxu0 %v37
  %159 = vmatprep.subr.mxu0 0.0
  %160 = vmatpush1.msra.mxu0 %v38
  %161 = vmatprep.subr.mxu0 0.0
  %162 = vmatpush1.msra.mxu0 %v39
  %163 = vmatprep.subr.mxu0 0.0
  %164 = vmatpush1.msra.mxu0 %v40
  %165 = vmatprep.subr.mxu0 0.0
  %166 = vmatpush1.msra.mxu0 %v41
  %167 = vmatprep.subr.mxu0 0.0
  %168 = vmatpush1.msra.mxu0 %v42
  %169 = vmatprep.subr.mxu0 0.0
  %170 = vmatpush1.msra.mxu0 %v43
  %171 = vmatprep.subr.mxu0 0.0
  %172 = vmatpush1.msra.mxu0 %v44
  %173 = vmatprep.subr.mxu0 0.0
  %174 = vmatpush1.msra.mxu0 %v45
  %175 = vmatprep.subr.mxu0 0.0
  %176 = vmatpush1.msra.mxu0 %v46
  %177 = vmatprep.subr.mxu0 0.0
  %178 = vmatpush1.msra.mxu0 0.0
  %179 = vmatprep.subr.mxu0 0.0
  %180 = vmatpush1.msra.mxu0 0.0
  %181 = vmatprep.subr.mxu0 0.0
  %182 = vmatpush1.msra.mxu0 0.0
  %183 = vmatprep.subr.mxu0 0.0
  %184 = vmatpush1.msra.mxu0 0.0
  %185 = vmatprep.subr.mxu0 0.0
  %186 = vmatpush1.msra.mxu0 0.0
  %187 = vmatprep.subr.mxu0 0.0
  %188 = vmatpush1.msra.mxu0 0.0
  %189 = vmatprep.subr.mxu0 0.0
  %190 = vmatpush1.msra.mxu0 0.0
  %191 = vmatprep.subr.mxu0 0.0
  %192 = vmatpush1.msra.mxu0 0.0
  %193 = vmatprep.subr.mxu0 0.0
  %194 = vmatpush1.msra.mxu0 0.0
  %195 = vmatprep.subr.mxu0 0.0
  %196 = vmatpush1.msra.mxu0 0.0
  %197 = vmatprep.subr.mxu0 0.0
  %198 = vmatpush1.msra.mxu0 0.0
  %199 = vmatprep.subr.mxu0 0.0
  %200 = vmatpush1.msra.mxu0 0.0
  %201 = vmatprep.subr.mxu0 0.0
  %202 = vmatpush1.msra.mxu0 0.0
  %203 = vmatprep.subr.mxu0 0.0
  %204 = vmatpush1.msra.mxu0 0.0
  %205 = vmatprep.subr.mxu0 0.0
  %206 = vmatpush1.msra.mxu0 0.0
  %207 = vmatprep.subr.mxu0 0.0
  %208 = vmatpush1.msra.mxu0 0.0
  %209 = vmatprep.mubr.f32.mxu0 0.0
  %210 = vmatmul.mubr.f32.gmra.mrb[0].mxu0 %v140
  %v211 = vpop.f32.mrb[0].mxu0
  %v212 = vadd.f32 %v144, %v211
  %v213 = vpop.f32.mrb[0].mxu0
  %214 = vdwg.mxu0
  %v215 = vmax.f32 %v212, 0.0
  %v216 = vlaneseq
  %v217 = vshrl.u32 %v216, 7
  %v218 = vsub.s32 0, %v217
  %v219 = vrot.slane %v65, %v218
  %220 = vmatprep.subr.mxu0 0.0
  %221 = vmatpush1.msra.mxu0 %v47
  %222 = vmatprep.subr.mxu0 0.0
  %223 = vmatpush1.msra.mxu0 %v48
  %224 = vmatprep.subr.mxu0 0.0
  %225 = vmatpush1.msra.mxu0 %v49
  %226 = vmatprep.subr.mxu0 0.0
  %227 = vmatpush1.msra.mxu0 %v50
  %228 = vmatprep.subr.mxu0 0.0
  %229 = vmatpush1.msra.mxu0 %v51
  %230 = vmatprep.subr.mxu0 0.0
  %231 = vmatpush1.msra.mxu0 %v52
  %232 = vmatprep.subr.mxu0 0.0
  %233 = vmatpush1.msra.mxu0 %v53
  %234 = vmatprep.subr.mxu0 0.0
  %235 = vmatpush1.msra.mxu0 %v54
  %236 = vmatprep.subr.mxu0 0.0
  %237 = vmatpush1.msra.mxu0 %v55
  %238 = vmatprep.subr.mxu0 0.0
  %239 = vmatpush1.msra.mxu0 %v56
  %240 = vmatprep.subr.mxu0 0.0
  %241 = vmatpush1.msra.mxu0 %v57
  %242 = vmatprep.subr.mxu0 0.0
  %243 = vmatpush1.msra.mxu0 %v58
  %244 = vmatprep.subr.mxu0 0.0
  %245 = vmatpush1.msra.mxu0 %v59
  %246 = vmatprep.subr.mxu0 0.0
  %247 = vmatpush1.msra.mxu0 %v60
  %248 = vmatprep.subr.mxu0 0.0
  %249 = vmatpush1.msra.mxu0 %v61
  %250 = vmatprep.subr.mxu0 0.0
  %251 = vmatpush1.msra.mxu0 %v62
  %252 = vmatprep.subr.mxu0 0.0
  %253 = vmatpush1.msra.mxu0 0.0
  %254 = vmatprep.subr.mxu0 0.0
  %255 = vmatpush1.msra.mxu0 0.0
  %256 = vmatprep.subr.mxu0 0.0
  %257 = vmatpush1.msra.mxu0 0.0
  %258 = vmatprep.subr.mxu0 0.0
  %259 = vmatpush1.msra.mxu0 0.0
  %260 = vmatprep.subr.mxu0 0.0
  %261 = vmatpush1.msra.mxu0 0.0
  %262 = vmatprep.subr.mxu0 0.0
  %263 = vmatpush1.msra.mxu0 0.0
  %264 = vmatprep.subr.mxu0 0.0
  %265 = vmatpush1.msra.mxu0 0.0
  %266 = vmatprep.subr.mxu0 0.0
  %267 = vmatpush1.msra.mxu0 0.0
  %268 = vmatprep.subr.mxu0 0.0
  %269 = vmatpush1.msra.mxu0 0.0
  %270 = vmatprep.subr.mxu0 0.0
  %271 = vmatpush1.msra.mxu0 0.0
  %272 = vmatprep.subr.mxu0 0.0
  %273 = vmatpush1.msra.mxu0 0.0
  %274 = vmatprep.subr.mxu0 0.0
  %275 = vmatpush1.msra.mxu0 0.0
  %276 = vmatprep.subr.mxu0 0.0
  %277 = vmatpush1.msra.mxu0 0.0
  %278 = vmatprep.subr.mxu0 0.0
  %279 = vmatpush1.msra.mxu0 0.0
  %280 = vmatprep.subr.mxu0 0.0
  %281 = vmatpush1.msra.mxu0 0.0
  %282 = vmatprep.subr.mxu0 0.0
  %283 = vmatpush1.msra.mxu0 0.0
  %284 = vmatprep.mubr.f32.mxu0 0.0
  %285 = vmatmul.mubr.f32.gmra.mrb[0].mxu0 %v215
  %v286 = vpop.f32.mrb[0].mxu0
  %v287 = vadd.f32 %v219, %v286
  %v288 = vpop.f32.mrb[0].mxu0
  %289 = vdwg.mxu0
  %290 = vst [vmem:[%s3] sm:$0xff] %v287
  // Predicated region
  $region14: #{mlp_forward.1} parent=0 // pred_check
    _
  $region15: #{mlp_forward.1} parent=0 // pred_check_branch
    %292 = sbr.rel (0) target = $region17
  $region16: #{mlp_forward.1} parent=0 // pred_region
    _
  $region17: #{mlp_forward.1} parent=0 // pred_fallthru
    _
  // Predicated region
  $region18: #{mlp_forward.1} parent=0 // pred_check
    _
  $region19: #{mlp_forward.1} parent=0 // pred_check_branch
    %294 = sbr.rel (0) target = $region21
  $region20: #{mlp_forward.1} parent=0 // pred_region
    _
  $region21: #{mlp_forward.1} parent=0 // pred_fallthru
    _

</llo_original>
